<compile_context>
chip_gen: v5e
topology: v5e:2x2
jax: 0.10.0
libtpu: 0.0.40
codegen_flags: <defaults>
</compile_context>

<pallas_src>
import functools

import jax
import jax.numpy as jnp
from jax.experimental import pallas as pl
from jax.experimental.pallas import tpu as pltpu


def _round_up(x, m):
    return (x + m - 1) // m * m


def _dwconv_kernel(x_hbm, w_ref, b_ref, o_ref, xpad_ref, dma_sem, *,
                   K, pad, TH, H, W):
    # x_hbm   : (N, H, W, C)     full input, resident in HBM (pl.ANY)
    # w_ref   : (K, K, C_BLK)    depthwise filters (channel-last), VMEM
    # b_ref   : (1, C_BLK)       bias, VMEM
    # o_ref   : (TH, Wo, C_BLK)  one row tile of the output (batch dim squeezed)
    # xpad_ref: (Hp, Wp_al, C_BLK) VMEM scratch: zero-padded image slab
    # dma_sem : DMA-completion semaphore for the HBM->scratch copy
    n = pl.program_id(0)
    c = pl.program_id(1)
    t = pl.program_id(2)

    Hp, Wp_al, C_BLK = xpad_ref.shape
    Wo = o_ref.shape[1]

    # ---- Fill the padded scratch once per (image, channel-block) ------------
    @pl.when(t == 0)
    def _():
        # One DMA straight from HBM into the scratch interior; the DMA engine
        # handles the unaligned (pad, pad) placement for free.
        cp = pltpu.make_async_copy(
            x_hbm.at[n, :, :, pl.ds(c * C_BLK, C_BLK)],
            xpad_ref.at[pad:pad + H, pad:pad + W, :],
            dma_sem)
        cp.start()
        # Zero only the pad border (the interior is fully overwritten by the
        # DMA); disjoint regions, so this overlaps with the in-flight DMA.
        zdt = xpad_ref.dtype
        if pad > 0:
            xpad_ref[0:pad, :, :] = jnp.zeros((pad, Wp_al, C_BLK), zdt)
            xpad_ref[pad + H:Hp, :, :] = jnp.zeros((Hp - pad - H, Wp_al, C_BLK), zdt)
            xpad_ref[pad:pad + H, 0:pad, :] = jnp.zeros((H, pad, C_BLK), zdt)
        if Wp_al > pad + W:
            xpad_ref[pad:pad + H, pad + W:Wp_al, :] = jnp.zeros(
                (H, Wp_al - pad - W, C_BLK), zdt)
        cp.wait()

    # ---- Compute this row tile ----------------------------------------------
    ho0 = t * TH                                       # first output row of tile

    # Hoist tiny weight / bias loads + f32 casts out of the row loop.
    w_f32 = w_ref[...].astype(jnp.float32)             # (K, K, C_BLK)
    w_taps = [[w_f32[kh:kh + 1, kw:kw + 1, :] for kw in range(K)]
              for kh in range(K)]                      # each (1, 1, C_BLK)
    b_row = b_ref[...].astype(jnp.float32).reshape(1, 1, C_BLK)

    def _row_body(i, carry):
        # Register-resident accumulator for one output row (a few vregs);
        # K*K VPU broadcast-FMAs, one lane-dense store.
        acc = jnp.zeros((1, Wo, C_BLK), jnp.float32)
        for kh in range(K):
            # One aligned, full-width padded row per kh (K loads per output
            # row instead of K*K misaligned ones).
            row = xpad_ref[pl.ds(ho0 + i + kh, 1), :, :].astype(jnp.float32)
            for kw in range(K):
                # Static in-register slice -> sublane shift (XLU), frees vld.
                acc = acc + row[:, kw:kw + Wo, :] * w_taps[kh][kw]
        o_ref[pl.ds(i, 1), :, :] = (acc + b_row).astype(o_ref.dtype)
        return carry

    jax.lax.fori_loop(0, TH, _row_body, 0)


def _pick_row_tile(Ho, Wo, c_blk, out_itemsize, budget_bytes=8 * 1024 * 1024):
    """Largest divisor of Ho whose double-buffered output tile fits the budget."""
    per_row = 2 * _round_up(Wo, 8) * _round_up(c_blk, 128) * out_itemsize
    max_rows = max(1, budget_bytes // per_row)
    th = min(Ho, max_rows)
    while Ho % th:
        th -= 1
    return th


def dwconv_pallas(x_nhwc, w, b, *, padding):
    """Depthwise conv2d (stride 1, `padding` zeros per side), NHWC in/out."""
    N, H, W, C = x_nhwc.shape
    K = w.shape[0]
    assert w.shape == (K, K, C), w.shape
    assert b.shape == (C,), b.shape

    Ho = H + 2 * padding - K + 1
    Wo = W + 2 * padding - K + 1
    assert Ho > 0 and Wo > 0

    # Channel tile: 128 lanes if it divides C (lane-dense), else the full C.
    C_BLK = 128 if C % 128 == 0 else C
    CT = C // C_BLK

    Hp = H + 2 * padding
    Wp = W + 2 * padding
    Wp_al = _round_up(Wp, 8)                       # sublane-align padded rows

    itemsize = x_nhwc.dtype.itemsize
    TH = _pick_row_tile(Ho, Wo, C_BLK, itemsize)   # adaptive row tile
    T = Ho // TH

    # VMEM budget: padded scratch + double-buffered output tile + w + b,
    # with headroom; clamp to [16 MiB, 64 MiB] (v7x physical ceiling).
    lanes = _round_up(C_BLK, 128)
    scratch_bytes = Hp * Wp_al * lanes * itemsize
    out_bytes = 2 * TH * _round_up(Wo, 8) * lanes * itemsize
    w_bytes = 2 * K * _round_up(K, 8) * lanes * w.dtype.itemsize
    b_bytes = 2 * 8 * lanes * b.dtype.itemsize
    est = int(1.5 * (scratch_bytes + out_bytes + w_bytes + b_bytes)) + (4 << 20)
    vmem_limit = max(16 << 20, min(64 << 20, est))

    kernel = functools.partial(_dwconv_kernel, K=K, pad=padding, TH=TH, H=H, W=W)
    b2 = b.reshape(1, C)

    return pl.pallas_call(
        kernel,
        out_shape=jax.ShapeDtypeStruct((N, Ho, Wo, C), x_nhwc.dtype),
        grid=(N, CT, T),
        in_specs=[
            pl.BlockSpec(memory_space=pl.ANY),                        # x in HBM
            pl.BlockSpec((K, K, C_BLK), lambda n, c, t: (0, 0, c)),   # weights
            pl.BlockSpec((1, C_BLK), lambda n, c, t: (0, c)),         # bias
        ],
        out_specs=pl.BlockSpec((None, TH, Wo, C_BLK),
                               lambda n, c, t: (n, t, 0, c)),
        scratch_shapes=[
            pltpu.VMEM((Hp, Wp_al, C_BLK), x_nhwc.dtype),
            pltpu.SemaphoreType.DMA,
        ],
        compiler_params=pltpu.CompilerParams(
            dimension_semantics=("parallel", "parallel", "arbitrary"),
            vmem_limit_bytes=vmem_limit),
    )(x_nhwc, w, b2)


class DWConvPallas:
    """Pallas port of the PyTorch DWConv module (depthwise Conv2d, bias=True)."""

    def __init__(self, embed_dim=768, kernel_size=3, padding=2, *, key):
        self.embed_dim = embed_dim
        self.kernel_size = kernel_size
        self.padding = padding
        kw_, kb_ = jax.random.split(key)
        # PyTorch Conv2d default init scale: fan_in = (C/groups)*k*k = k*k.
        bound = 1.0 / float(kernel_size * kernel_size) ** 0.5
        # Weight stored channel-last: (K, K, C)   (PyTorch layout is (C, 1, K, K)).
        self.weight = jax.random.uniform(
            kw_, (kernel_size, kernel_size, embed_dim), jnp.float32, -bound, bound)
        self.bias = jax.random.uniform(
            kb_, (embed_dim,), jnp.float32, -bound, bound)

    def __call__(self, x_nchw):
        # TODO(synk): on v6e/v7x, cast x/weight to bf16 here to halve HBM DMA
        # bytes and scratch VMEM (accumulation stays f32 inside the kernel).
        x = jnp.transpose(x_nchw, (0, 2, 3, 1))          # NCHW -> NHWC (C on lanes)
        y = dwconv_pallas(x, self.weight, self.bias, padding=self.padding)
        return jnp.transpose(y, (0, 3, 1, 2))            # back to NCHW


def _reference(x_nchw, module):
    """Pure-JAX depthwise reference (feature_group_count = C)."""
    C = module.embed_dim
    w_hwio = module.weight[:, :, None, :]                # (K, K, 1, C)
    y = jax.lax.conv_general_dilated(
        x_nchw, w_hwio, window_strides=(1, 1),
        padding=[(module.padding, module.padding)] * 2,
        dimension_numbers=("NCHW", "HWIO", "NCHW"),
        feature_group_count=C)
    return y + module.bias.reshape(1, C, 1, 1)


if __name__ == "__main__":
    key = jax.random.PRNGKey(0)
    kx, kp = jax.random.split(key)

    # Small but lane-dense shapes: C = 128 channels, 16x16 spatial, batch 2.
    N, embed_dim, H, W = 2, 128, 16, 16
    module = DWConvPallas(embed_dim=embed_dim, kernel_size=3, padding=2, key=kp)
    x = jax.random.normal(kx, (N, embed_dim, H, W), jnp.float32)   # NCHW like PyTorch

    out = jax.block_until_ready(module(x))
    ref = jax.block_until_ready(_reference(x, module))

    # padding=2 with kernel_size=3 grows spatial dims by 2 (matches PyTorch).
    assert out.shape == (N, embed_dim, H + 2, W + 2), out.shape
    max_err = float(jnp.max(jnp.abs(out - ref)))
    assert jnp.allclose(out, ref, atol=1e-5, rtol=1e-5), max_err

    print("KERNEL_OK")
</pallas_src>

<mosaic_0001>
module attributes {stable_mosaic.version = 11 : i64} {
  func.func @_dwconv_kernel(%arg0: i32, %arg1: i32, %arg2: i32, %arg3: memref<2x16x16x128xf32, #tpu.memory_space<any>>, %arg4: memref<3x3x128xf32, #tpu.memory_space<vmem>>, %arg5: memref<1x128xf32, #tpu.memory_space<vmem>>, %arg6: memref<1x18x18x128xf32, #tpu.memory_space<vmem>>, %arg7: memref<20x24x128xf32, #tpu.memory_space<vmem>>, %arg8: memref<!tpu.dma_semaphore, #tpu.memory_space<semaphore_mem>>) attributes {dimension_semantics = [#tpu.dimension_semantics<parallel>, #tpu.dimension_semantics<parallel>, #tpu.dimension_semantics<arbitrary>], iteration_bounds = array<i64: 2, 1, 1>, scalar_prefetch = 0 : i64, scratch_operands = 2 : i64, tpu.core_type = #tpu.core_type<tc>, window_params = [{}, {transform_indices = @transform_1, window_bounds = array<i64: 3, 3, 128>}, {transform_indices = @transform_2, window_bounds = array<i64: 1, 128>}, {transform_indices = @transform_3, window_bounds = array<i64: 1, 18, 18, 128>}]} {
    %c0_i32 = arith.constant 0 : i32
    %0 = arith.cmpi eq, %arg2, %c0_i32 : i32
    %1 = arith.extui %0 : i1 to i32
    %c0_i32_0 = arith.constant 0 : i32
    %2 = arith.cmpi ne, %1, %c0_i32_0 : i32
    scf.if %2 {
      %c128_i32 = arith.constant 128 : i32
      %17 = arith.muli %arg1, %c128_i32 : i32
      %c0_i32_8 = arith.constant 0 : i32
      %c0_i32_9 = arith.constant 0 : i32
      %18 = tpu.memref_slice %arg3[%arg0, %c0_i32_8, %c0_i32_9, %17] : memref<2x16x16x128xf32, #tpu.memory_space<any>> -> memref<1x16x16x128xf32, #tpu.memory_space<any>>
      %19 = tpu.memref_squeeze %18 : memref<1x16x16x128xf32, #tpu.memory_space<any>> -> memref<16x16x128xf32, #tpu.memory_space<any>>
      %c2_i32 = arith.constant 2 : i32
      %c2_i32_10 = arith.constant 2 : i32
      %c0_i32_11 = arith.constant 0 : i32
      %20 = tpu.memref_slice %arg7[%c2_i32, %c2_i32_10, %c0_i32_11] : memref<20x24x128xf32, #tpu.memory_space<vmem>> -> memref<16x16x128xf32, #tpu.memory_space<vmem>>
      tpu.enqueue_dma source(%19 : memref<16x16x128xf32, #tpu.memory_space<any>>) target(%20 : memref<16x16x128xf32, #tpu.memory_space<vmem>>) target_semaphore(%arg8 : memref<!tpu.dma_semaphore, #tpu.memory_space<semaphore_mem>>)
      %cst = arith.constant 0.000000e+00 : f32
      %21 = vector.broadcast %cst : f32 to vector<2x24x128xf32>
      %c0_12 = arith.constant 0 : index
      %c0_13 = arith.constant 0 : index
      %c0_14 = arith.constant 0 : index
      %22 = vector.load %arg7[%c0_12, %c0_13, %c0_14] : memref<20x24x128xf32, #tpu.memory_space<vmem>>, vector<2x24x128xf32>
      tpu.vector_store %arg7[%c0_12, %c0_13, %c0_14], %21 {strides = array<i32>} : memref<20x24x128xf32, #tpu.memory_space<vmem>>, vector<2x24x128xf32>,
      %cst_15 = arith.constant 0.000000e+00 : f32
      %23 = vector.broadcast %cst_15 : f32 to vector<2x24x128xf32>
      %c18 = arith.constant 18 : index
      %c0_16 = arith.constant 0 : index
      %c0_17 = arith.constant 0 : index
      %24 = vector.load %arg7[%c18, %c0_16, %c0_17] : memref<20x24x128xf32, #tpu.memory_space<vmem>>, vector<2x24x128xf32>
      tpu.vector_store %arg7[%c18, %c0_16, %c0_17], %23 {strides = array<i32>} : memref<20x24x128xf32, #tpu.memory_space<vmem>>, vector<2x24x128xf32>,
      %cst_18 = arith.constant 0.000000e+00 : f32
      %25 = vector.broadcast %cst_18 : f32 to vector<16x2x128xf32>
      %c2 = arith.constant 2 : index
      %c0_19 = arith.constant 0 : index
      %c0_20 = arith.constant 0 : index
      %26 = vector.load %arg7[%c2, %c0_19, %c0_20] : memref<20x24x128xf32, #tpu.memory_space<vmem>>, vector<16x2x128xf32>
      tpu.vector_store %arg7[%c2, %c0_19, %c0_20], %25 {strides = array<i32>} : memref<20x24x128xf32, #tpu.memory_space<vmem>>, vector<16x2x128xf32>,
      %cst_21 = arith.constant 0.000000e+00 : f32
      %27 = vector.broadcast %cst_21 : f32 to vector<16x6x128xf32>
      %c2_22 = arith.constant 2 : index
      %c18_23 = arith.constant 18 : index
      %c0_24 = arith.constant 0 : index
      %28 = vector.load %arg7[%c2_22, %c18_23, %c0_24] : memref<20x24x128xf32, #tpu.memory_space<vmem>>, vector<16x6x128xf32>
      tpu.vector_store %arg7[%c2_22, %c18_23, %c0_24], %27 {strides = array<i32>} : memref<20x24x128xf32, #tpu.memory_space<vmem>>, vector<16x6x128xf32>,
      %c0_i32_25 = arith.constant 0 : i32
      %c0_i32_26 = arith.constant 0 : i32
      %29 = tpu.memref_slice %arg3[%arg0, %c0_i32_25, %c0_i32_26, %17] : memref<2x16x16x128xf32, #tpu.memory_space<any>> -> memref<1x16x16x128xf32, #tpu.memory_space<any>>
      %30 = tpu.memref_squeeze %29 : memref<1x16x16x128xf32, #tpu.memory_space<any>> -> memref<16x16x128xf32, #tpu.memory_space<any>>
      %c2_i32_27 = arith.constant 2 : i32
      %c2_i32_28 = arith.constant 2 : i32
      %c0_i32_29 = arith.constant 0 : i32
      %31 = tpu.memref_slice %arg7[%c2_i32_27, %c2_i32_28, %c0_i32_29] : memref<20x24x128xf32, #tpu.memory_space<vmem>> -> memref<16x16x128xf32, #tpu.memory_space<vmem>>
      tpu.wait_dma2 semaphore(%arg8 : memref<!tpu.dma_semaphore, #tpu.memory_space<semaphore_mem>>) src(%30 : memref<16x16x128xf32, #tpu.memory_space<any>>) dst(%31 : memref<16x16x128xf32, #tpu.memory_space<vmem>>)
    } else {
    }
    %c18_i32 = arith.constant 18 : i32
    %3 = arith.muli %arg2, %c18_i32 : i32
    %c0 = arith.constant 0 : index
    %c0_1 = arith.constant 0 : index
    %c0_2 = arith.constant 0 : index
    %4 = vector.load %arg4[%c0, %c0_1, %c0_2] : memref<3x3x128xf32, #tpu.memory_space<vmem>>, vector<3x3x128xf32>
    %5 = vector.extract_strided_slice %4 {offsets = [0, 0, 0], sizes = [1, 1, 128], strides = [1, 1, 1]} : vector<3x3x128xf32> to vector<1x1x128xf32>
    %6 = vector.extract_strided_slice %4 {offsets = [0, 1, 0], sizes = [1, 1, 128], strides = [1, 1, 1]} : vector<3x3x128xf32> to vector<1x1x128xf32>
    %7 = vector.extract_strided_slice %4 {offsets = [0, 2, 0], sizes = [1, 1, 128], strides = [1, 1, 1]} : vector<3x3x128xf32> to vector<1x1x128xf32>
    %8 = vector.extract_strided_slice %4 {offsets = [1, 0, 0], sizes = [1, 1, 128], strides = [1, 1, 1]} : vector<3x3x128xf32> to vector<1x1x128xf32>
    %9 = vector.extract_strided_slice %4 {offsets = [1, 1, 0], sizes = [1, 1, 128], strides = [1, 1, 1]} : vector<3x3x128xf32> to vector<1x1x128xf32>
    %10 = vector.extract_strided_slice %4 {offsets = [1, 2, 0], sizes = [1, 1, 128], strides = [1, 1, 1]} : vector<3x3x128xf32> to vector<1x1x128xf32>
    %11 = vector.extract_strided_slice %4 {offsets = [2, 0, 0], sizes = [1, 1, 128], strides = [1, 1, 1]} : vector<3x3x128xf32> to vector<1x1x128xf32>
    %12 = vector.extract_strided_slice %4 {offsets = [2, 1, 0], sizes = [1, 1, 128], strides = [1, 1, 1]} : vector<3x3x128xf32> to vector<1x1x128xf32>
    %13 = vector.extract_strided_slice %4 {offsets = [2, 2, 0], sizes = [1, 1, 128], strides = [1, 1, 1]} : vector<3x3x128xf32> to vector<1x1x128xf32>
    %c0_3 = arith.constant 0 : index
    %c0_4 = arith.constant 0 : index
    %14 = vector.load %arg5[%c0_3, %c0_4] : memref<1x128xf32, #tpu.memory_space<vmem>>, vector<1x128xf32>
    %15 = vector.shape_cast %14 : vector<1x128xf32> to vector<1x1x128xf32>
    %c0_i32_5 = arith.constant 0 : i32
    %c18_i32_6 = arith.constant 18 : i32
    %16 = arith.addi %c0_i32_5, %c18_i32_6 : i32
    %c1_i32 = arith.constant 1 : i32
    scf.for %arg9 = %c0_i32_5 to %16 step %c1_i32  : i32 {
      %cst = arith.constant 0.000000e+00 : f32
      %17 = vector.broadcast %cst : f32 to vector<1x18x128xf32>
      %18 = arith.addi %3, %arg9 : i32
      %c0_i32_8 = arith.constant 0 : i32
      %19 = arith.addi %18, %c0_i32_8 : i32
      %20 = arith.index_cast %19 : i32 to index
      %c0_9 = arith.constant 0 : index
      %c0_10 = arith.constant 0 : index
      %21 = vector.load %arg7[%20, %c0_9, %c0_10] : memref<20x24x128xf32, #tpu.memory_space<vmem>>, vector<1x24x128xf32>
      %22 = vector.extract_strided_slice %21 {offsets = [0, 0, 0], sizes = [1, 18, 128], strides = [1, 1, 1]} : vector<1x24x128xf32> to vector<1x18x128xf32>
      %23 = vector.broadcast %5 : vector<1x1x128xf32> to vector<1x18x128xf32>
      %24 = arith.mulf %22, %23 : vector<1x18x128xf32>
      %25 = arith.addf %17, %24 : vector<1x18x128xf32>
      %26 = vector.extract_strided_slice %21 {offsets = [0, 1, 0], sizes = [1, 18, 128], strides = [1, 1, 1]} : vector<1x24x128xf32> to vector<1x18x128xf32>
      %27 = vector.broadcast %6 : vector<1x1x128xf32> to vector<1x18x128xf32>
      %28 = arith.mulf %26, %27 : vector<1x18x128xf32>
      %29 = arith.addf %25, %28 : vector<1x18x128xf32>
      %30 = vector.extract_strided_slice %21 {offsets = [0, 2, 0], sizes = [1, 18, 128], strides = [1, 1, 1]} : vector<1x24x128xf32> to vector<1x18x128xf32>
      %31 = vector.broadcast %7 : vector<1x1x128xf32> to vector<1x18x128xf32>
      %32 = arith.mulf %30, %31 : vector<1x18x128xf32>
      %33 = arith.addf %29, %32 : vector<1x18x128xf32>
      %34 = arith.addi %3, %arg9 : i32
      %c1_i32_11 = arith.constant 1 : i32
      %35 = arith.addi %34, %c1_i32_11 : i32
      %36 = arith.index_cast %35 : i32 to index
      %c0_12 = arith.constant 0 : index
      %c0_13 = arith.constant 0 : index
      %37 = vector.load %arg7[%36, %c0_12, %c0_13] : memref<20x24x128xf32, #tpu.memory_space<vmem>>, vector<1x24x128xf32>
      %38 = vector.extract_strided_slice %37 {offsets = [0, 0, 0], sizes = [1, 18, 128], strides = [1, 1, 1]} : vector<1x24x128xf32> to vector<1x18x128xf32>
      %39 = vector.broadcast %8 : vector<1x1x128xf32> to vector<1x18x128xf32>
      %40 = arith.mulf %38, %39 : vector<1x18x128xf32>
      %41 = arith.addf %33, %40 : vector<1x18x128xf32>
      %42 = vector.extract_strided_slice %37 {offsets = [0, 1, 0], sizes = [1, 18, 128], strides = [1, 1, 1]} : vector<1x24x128xf32> to vector<1x18x128xf32>
      %43 = vector.broadcast %9 : vector<1x1x128xf32> to vector<1x18x128xf32>
      %44 = arith.mulf %42, %43 : vector<1x18x128xf32>
      %45 = arith.addf %41, %44 : vector<1x18x128xf32>
      %46 = vector.extract_strided_slice %37 {offsets = [0, 2, 0], sizes = [1, 18, 128], strides = [1, 1, 1]} : vector<1x24x128xf32> to vector<1x18x128xf32>
      %47 = vector.broadcast %10 : vector<1x1x128xf32> to vector<1x18x128xf32>
      %48 = arith.mulf %46, %47 : vector<1x18x128xf32>
      %49 = arith.addf %45, %48 : vector<1x18x128xf32>
      %50 = arith.addi %3, %arg9 : i32
      %c2_i32 = arith.constant 2 : i32
      %51 = arith.addi %50, %c2_i32 : i32
      %52 = arith.index_cast %51 : i32 to index
      %c0_14 = arith.constant 0 : index
      %c0_15 = arith.constant 0 : index
      %53 = vector.load %arg7[%52, %c0_14, %c0_15] : memref<20x24x128xf32, #tpu.memory_space<vmem>>, vector<1x24x128xf32>
      %54 = vector.extract_strided_slice %53 {offsets = [0, 0, 0], sizes = [1, 18, 128], strides = [1, 1, 1]} : vector<1x24x128xf32> to vector<1x18x128xf32>
      %55 = vector.broadcast %11 : vector<1x1x128xf32> to vector<1x18x128xf32>
      %56 = arith.mulf %54, %55 : vector<1x18x128xf32>
      %57 = arith.addf %49, %56 : vector<1x18x128xf32>
      %58 = vector.extract_strided_slice %53 {offsets = [0, 1, 0], sizes = [1, 18, 128], strides = [1, 1, 1]} : vector<1x24x128xf32> to vector<1x18x128xf32>
      %59 = vector.broadcast %12 : vector<1x1x128xf32> to vector<1x18x128xf32>
      %60 = arith.mulf %58, %59 : vector<1x18x128xf32>
      %61 = arith.addf %57, %60 : vector<1x18x128xf32>
      %62 = vector.extract_strided_slice %53 {offsets = [0, 2, 0], sizes = [1, 18, 128], strides = [1, 1, 1]} : vector<1x24x128xf32> to vector<1x18x128xf32>
      %63 = vector.broadcast %13 : vector<1x1x128xf32> to vector<1x18x128xf32>
      %64 = arith.mulf %62, %63 : vector<1x18x128xf32>
      %65 = arith.addf %61, %64 : vector<1x18x128xf32>
      %66 = vector.broadcast %15 : vector<1x1x128xf32> to vector<1x18x128xf32>
      %67 = arith.addf %65, %66 : vector<1x18x128xf32>
      %c0_16 = arith.constant 0 : index
      %68 = arith.index_cast %arg9 : i32 to index
      %c0_17 = arith.constant 0 : index
      %c0_18 = arith.constant 0 : index
      %69 = vector.load %arg6[%c0_16, %68, %c0_17, %c0_18] : memref<1x18x18x128xf32, #tpu.memory_space<vmem>>, vector<1x1x18x128xf32>
      %70 = vector.shape_cast %69 : vector<1x1x18x128xf32> to vector<1x18x128xf32>
      %71 = vector.shape_cast %67 : vector<1x18x128xf32> to vector<1x1x18x128xf32>
      tpu.vector_store %arg6[%c0_16, %68, %c0_17, %c0_18], %71 {strides = array<i32>} : memref<1x18x18x128xf32, #tpu.memory_space<vmem>>, vector<1x1x18x128xf32>,
    }
    %c18_i32_7 = arith.constant 18 : i32
    return
  }
  func.func @transform_1(%arg0: i32, %arg1: i32, %arg2: i32) -> (i32, i32, i32) {
    %c0_i32 = arith.constant 0 : i32
    %c0_i32_0 = arith.constant 0 : i32
    %c0_i32_1 = arith.constant 0 : i32
    return %c0_i32, %c0_i32_0, %arg1 : i32, i32, i32
  }
  func.func @transform_2(%arg0: i32, %arg1: i32, %arg2: i32) -> (i32, i32) {
    %c0_i32 = arith.constant 0 : i32
    %c0_i32_0 = arith.constant 0 : i32
    return %c0_i32, %arg1 : i32, i32
  }
  func.func @transform_3(%arg0: i32, %arg1: i32, %arg2: i32) -> (i32, i32, i32, i32) {
    %c0_i32 = arith.constant 0 : i32
    %c0_i32_0 = arith.constant 0 : i32
    return %arg0, %arg2, %c0_i32, %arg1 : i32, i32, i32, i32
  }
}

</mosaic_0001>

<llo_original>
// kernel: tpu_custom_call.1
$region0: #{tpu_custom_call.1}
  #allocation0 [shape = 'u32[]', space=smem, size = 0x4, offset = 0x4, fixed_abs, tag = 'smem constant byte address 0x4 - core index']
  #allocation1 [shape = 'u32[72,128]{1,0:T(1,128)}', space=vmem, size = 0x9000, scoped, tag = 'internal scratch']
  #allocation2 [shape = 'f32[20,24,128]{2,1,0:T(8,128)}', space=vmem, size = 0x3c000, scoped, tag = 'scratch operand']
  #allocation3 [shape = 's32[1]{0}', space=sflag, size = 0x4, scoped, tag = 'scratch operand']
  #allocation6 [shape = 's32[]', space=sflag, size = 0x4, offset = 0, fixed_abs, tag = 'sflag constant byte address 0x0 - dummy sync flag']
  %s0 = inlined_call_operand.hbm [shape: f32[2,16,16,128], index: 0, kind: input, shape index: {}]
  %s1 = inlined_call_operand.hbm [shape: f32[3,3,128], index: 1, kind: input, shape index: {}]
  %s2 = inlined_call_operand.vmem [shape: f32[1,128], index: 2, kind: input, shape index: {}]
  %s3 = inlined_call_operand.vmem [shape: f32[2,18,18,128], index: 3, kind: output, shape index: {}]
  %s4 = sld [smem:[#allocation0]]
  $region56: #{tpu_custom_call.1} parent=0
    _
  %s6 = ssub.s32 1, %s4
  %s7 = scalar_select 0, %s6, %s4
  $region1: #{tpu_custom_call.1} parent=0
    #allocation4 [shape = 'u8[6144]{0}', space=vmem, size = 0x1800, scoped, tag = 'input window, operand 1, single buffered']
    #allocation5 [shape = 's32[2]{0}', space=sflag, size = 0x8, scoped, tag = 'scoped memory for tpu_custom_call.1']
    %8 = vsyncpa [#allocation5], 0
    loop: start=0, step=1, limit=4
    $region2: #{tpu_custom_call.1} parent=1 // loop_pre_header
      _
    $region3: #{tpu_custom_call.1} parent=1 // loop_header
      %s10 = sphi 0, %s14
      %p11 = scmp.ge.s32.totalorder %s10, 4
      %s17 = sphi 0, %s36
      %s18 = sphi 0, %s32
      %s19 = sphi 0, %s28
      %s20 = sphi 0, %s17
      %s21 = sphi 0, %s18
      %s22 = sphi 0, %s19
      %s23 = sphi 0, %s20
      %s24 = sphi 0, %s21
      %s25 = sphi 0, %s22
      %s39 = sphi 0, %s41
      %s42 = sphi 0, %s39
      %s43 = sphi 0, %s42
      %s59 = sphi 0, %s43
      %s65 = sphi 0, %s67
      %s68 = sphi 0, %s65
      %s69 = sphi 0, %s68
      %s85 = sphi 0, %s69
      %s95 = sphi 0, %s97
      %s98 = sphi 0, %s95
      %s99 = sphi 0, %s98
      %s115 = sphi 0, %s99
    $region4: #{tpu_custom_call.1} parent=1 // loop_header_branch
      %13 = sbr.rel (%p11) target = $region8
    $region5: #{tpu_custom_call.1} parent=1 // loop_body
      %s15 = ssub.s32 %s10, 1
      %s16 = ssub.s32 %s10, 2
      %s26 = sadd.s32 1, %s19
      %p27 = scmp.ge.s32.totalorder %s26, 1
      %s28 = scalar_select %p27, 0, %s26
      %s29 = sadd.s32 1, %s18
      %s30 = scalar_select %p27, %s29, %s18
      %p31 = scmp.ge.s32.totalorder %s30, 1
      %s32 = scalar_select %p31, 0, %s30
      %s33 = sadd.s32 1, %s17
      %s34 = scalar_select %p31, %s33, %s17
      %p35 = scmp.ge.s32.totalorder %s34, 2
      %s36 = scalar_select %p35, 0, %s34
      %s37 = ssub.s32 %s18, %s32
      %p38 = scmp.eq.s32.totalorder %s37, 0
      %s40 = sadd.s32 %s39, 1
      %s41 = scalar_select %p38, %s39, %s40
      %p44 = pneg %p38
      %p45 = scmp.eq.s32.totalorder %s10, 1
      %p46 = por %p44, %p45
      %p47 = scmp.ne.s32.totalorder %s39, %s42
      %p48 = scmp.eq.s32.totalorder %s10, 0
      %p49 = por %p47, %p48
      %p50 = scmp.ne.s32.totalorder %s39, %s42
      %p51 = scmp.eq.s32.totalorder %s15, 1
      %p52 = por %p50, %p51
      %p53 = scmp.ne.s32.totalorder %s42, %s43
      %p54 = scmp.eq.s32.totalorder %s15, 0
      %p55 = por %p53, %p54
      %p56 = scmp.ne.s32.totalorder %s42, %s43
      %p57 = scmp.eq.s32.totalorder %s16, 1
      %p58 = por %p56, %p57
      %p60 = scmp.ne.s32.totalorder %s43, %s59
      %p61 = scmp.eq.s32.totalorder %s16, 0
      %p62 = por %p60, %p61
      %s63 = ssub.s32 %s18, %s32
      %p64 = scmp.eq.s32.totalorder %s63, 0
      %s66 = sadd.s32 %s65, 1
      %s67 = scalar_select %p64, %s65, %s66
      %p70 = pneg %p64
      %p71 = scmp.eq.s32.totalorder %s10, 1
      %p72 = por %p70, %p71
      %p73 = scmp.ne.s32.totalorder %s65, %s68
      %p74 = scmp.eq.s32.totalorder %s10, 0
      %p75 = por %p73, %p74
      %p76 = scmp.ne.s32.totalorder %s65, %s68
      %p77 = scmp.eq.s32.totalorder %s15, 1
      %p78 = por %p76, %p77
      %p79 = scmp.ne.s32.totalorder %s68, %s69
      %p80 = scmp.eq.s32.totalorder %s15, 0
      %p81 = por %p79, %p80
      %p82 = scmp.ne.s32.totalorder %s68, %s69
      %p83 = scmp.eq.s32.totalorder %s16, 1
      %p84 = por %p82, %p83
      %p86 = scmp.ne.s32.totalorder %s69, %s85
      %p87 = scmp.eq.s32.totalorder %s16, 0
      %p88 = por %p86, %p87
      %s89 = ssub.s32 %s17, %s36
      %s90 = ssub.s32 %s19, %s28
      %s91 = sor.u32 %s89, %s90
      %s92 = ssub.s32 %s18, %s32
      %s93 = sor.u32 %s91, %s92
      %p94 = scmp.eq.s32.totalorder %s93, 0
      %s96 = sadd.s32 %s95, 1
      %s97 = scalar_select %p94, %s95, %s96
      %p100 = pneg %p94
      %p101 = scmp.eq.s32.totalorder %s10, 1
      %p102 = por %p100, %p101
      %p103 = scmp.ne.s32.totalorder %s95, %s98
      %p104 = scmp.eq.s32.totalorder %s10, 0
      %p105 = por %p103, %p104
      %p106 = scmp.ne.s32.totalorder %s95, %s98
      %p107 = scmp.eq.s32.totalorder %s15, 1
      %p108 = por %p106, %p107
      %p109 = scmp.ne.s32.totalorder %s98, %s99
      %p110 = scmp.eq.s32.totalorder %s15, 0
      %p111 = por %p109, %p110
      %p112 = scmp.ne.s32.totalorder %s98, %s99
      %p113 = scmp.eq.s32.totalorder %s16, 1
      %p114 = por %p112, %p113
      %p116 = scmp.ne.s32.totalorder %s99, %s115
      %p117 = scmp.eq.s32.totalorder %s16, 0
      %p118 = por %p116, %p117
      %p119 = scmp.le.s32.totalorder 1, %s10
      %p120 = scmp.lt.s32.totalorder %s10, 3
      %p121 = pnand %p119, %p120
      %p122 = pneg %p121
      // Predicated region
      $region9: #{tpu_custom_call.1} parent=5 // pred_check
        _
      $region10: #{tpu_custom_call.1} parent=5 // pred_check_branch
        %124 = sbr.rel (%p121) target = $region12
      $region11: #{tpu_custom_call.1} parent=5 // pred_region
        %s125 = ssub.s32 %s10, 1
        // Predicated region
        $region13: #{tpu_custom_call.1} parent=11 // pred_check
          %p126 = pneg %p55
        $region14: #{tpu_custom_call.1} parent=11 // pred_check_branch
          %128 = sbr.rel (%p126) target = $region16
        $region15: #{tpu_custom_call.1} parent=11 // pred_region
          %130 = vsyncadd [#allocation5], 0
          %s131 = smul.addr %s21, 4
          %s132 = scalar_lea.hbm %s1, %s131
          %s133 = sshll.u32 %s132, 4
          %s134 = int_to_ptr.hbm [resolvable:$true] %s133
          %s135 = sshll.u32 [#allocation4], 4
          %s136 = int_to_ptr.vmem [resolvable:$true] %s135
          %141 = dma.hbm_to_vmem [thread:$0]  %s134, 192, %s136, [#allocation5], 64, 64, 4
        $region16: #{tpu_custom_call.1} parent=11 // pred_fallthru
          _
        // Predicated region
        $region17: #{tpu_custom_call.1} parent=11 // pred_check
          %p142 = pneg %p81
        $region18: #{tpu_custom_call.1} parent=11 // pred_check_branch
          %144 = sbr.rel (%p142) target = $region20
        $region19: #{tpu_custom_call.1} parent=11 // pred_region
          %p145 = scmp.lt.s32.totalorder %s21, 0
          %s146 = scalar_select %p145, %s21, 0
          %s147 = scalar_lea.vmem %s2, %s146
        $region20: #{tpu_custom_call.1} parent=11 // pred_fallthru
          _
      $region12: #{tpu_custom_call.1} parent=5 // pred_fallthru
        _
      %p148 = scmp.lt.s32.totalorder %s10, 2
      // Predicated region
      $region21: #{tpu_custom_call.1} parent=5 // pred_check
        %p149 = pneg %p148
      $region22: #{tpu_custom_call.1} parent=5 // pred_check_branch
        %151 = sbr.rel (%p149) target = $region24
      $region23: #{tpu_custom_call.1} parent=5 // pred_region
        _
      $region24: #{tpu_custom_call.1} parent=5 // pred_fallthru
        _
      %p152 = scmp.le.s32.totalorder 1, %s10
      %p153 = scmp.lt.s32.totalorder %s10, 3
      %p154 = pnand %p152, %p153
      %p155 = pneg %p154
      // Predicated region
      $region25: #{tpu_custom_call.1} parent=5 // pred_check
        _
      $region26: #{tpu_custom_call.1} parent=5 // pred_check_branch
        %157 = sbr.rel (%p154) target = $region28
      $region27: #{tpu_custom_call.1} parent=5 // pred_region
        %s158 = ssub.s32 %s10, 1
        // Predicated region
        $region29: #{tpu_custom_call.1} parent=27 // pred_check
          %p159 = pneg %p55
        $region30: #{tpu_custom_call.1} parent=27 // pred_check_branch
          %161 = sbr.rel (%p159) target = $region32
        $region31: #{tpu_custom_call.1} parent=27 // pred_region
          %163 = dma.done [#allocation5], 192
        $region32: #{tpu_custom_call.1} parent=27 // pred_fallthru
          _
        %p164 = pneg %p55
        %p165 = pneg %p52
        %p166 = scmp.lt.s32.totalorder %s21, 0
        %s167 = scalar_select %p166, %s21, 0
        %s168 = scalar_lea.vmem %s2, %s167
        %p169 = pneg %p81
        %p170 = pneg %p78
        %p171 = pneg %p111
        %p172 = pneg %p108
        %s173 = smul.u32 18, %s22
        %p174 = scmp.lt.s32.totalorder %s20, 1
        %s175 = scalar_select %p174, %s20, 1
        %p176 = scmp.lt.s32.totalorder %s173, 17
        %s177 = scalar_select %p176, %s173, 17
        %p178 = scmp.lt.s32.totalorder %s21, 0
        %s179 = scalar_select %p178, %s21, 0
        %s180 = smul.addr %s177, 3
        %s181 = sadd.s32 %s179, %s180
        %s182 = smul.addr %s175, 54
        %s183 = sadd.s32 %s181, %s182
        %s184 = smul.addr %s183, 8
        %s185 = scalar_lea.vmem %s3, %s184
        %p186 = scmp.lt.s32.totalorder %s21, 0
        %s187 = scalar_select %p186, %s21, 0
        %s188 = scalar_lea.vmem %s2, %s187
        %s189 = smul.u32 18, %s22
        %p190 = scmp.lt.s32.totalorder %s20, 1
        %s191 = scalar_select %p190, %s20, 1
        %p192 = scmp.lt.s32.totalorder %s189, 17
        %s193 = scalar_select %p192, %s189, 17
        %p194 = scmp.lt.s32.totalorder %s21, 0
        %s195 = scalar_select %p194, %s21, 0
        %s196 = smul.addr %s193, 3
        %s197 = sadd.s32 %s195, %s196
        %s198 = smul.addr %s191, 54
        %s199 = sadd.s32 %s197, %s198
        %s200 = smul.addr %s199, 8
        %s201 = scalar_lea.vmem %s3, %s200
        %s202 = smul.u32 18, %s22
        %p203 = scmp.eq.s32.totalorder %s22, 0
        // Predicated region
        $region33: #{tpu_custom_call.1} parent=27 // pred_check
          %p204 = pneg %p203
        $region34: #{tpu_custom_call.1} parent=27 // pred_check_branch
          %206 = sbr.rel (%p204) target = $region36
        $region35: #{tpu_custom_call.1} parent=27 // pred_region
          %s207 = smul.u32 %s21, 128
          %s208 = sshra.s32 %s207, 7
          %s209 = sand.u32 %s207, 127
          %s210 = smul.u32 %s20, 256
          %s211 = sadd.s32 %s208, %s210
          %s212 = scalar_lea.hbm %s0, %s211
          %s213 = scalar_lea.vmem [#allocation2], 50
          %s214 = sshll.u32 %s212, 4
          %s215 = int_to_ptr.hbm [resolvable:$true] %s214
          %s216 = sshll.u32 %s213, 4
          %s217 = int_to_ptr.vmem [resolvable:$true] %s216
          %221 = dma.hbm_to_vmem [thread:$0]  %s215, 4096, %s217, [#allocation3], 256, 384, 16
          %222 = vst [vmem:[#allocation2] sm:$0xff] 0.0
          %223 = vst [vmem:[#allocation2 + $0x8] sm:$0xff] 0.0
          %224 = vst [vmem:[#allocation2 + $0x10] sm:$0xff] 0.0
          %225 = vst [vmem:[#allocation2 + $0x18] sm:$0xff] 0.0
          %226 = vst [vmem:[#allocation2 + $0x20] sm:$0xff] 0.0
          %227 = vst [vmem:[#allocation2 + $0x28] sm:$0xff] 0.0
          %s228 = scalar_lea.vmem [#allocation2], 432
          %229 = vst [vmem:[%s228] sm:$0xff] 0.0
          %230 = vst [vmem:[%s228 + $0x8] sm:$0xff] 0.0
          %231 = vst [vmem:[%s228 + $0x10] sm:$0xff] 0.0
          %232 = vst [vmem:[%s228 + $0x18] sm:$0xff] 0.0
          %233 = vst [vmem:[%s228 + $0x20] sm:$0xff] 0.0
          %234 = vst [vmem:[%s228 + $0x28] sm:$0xff] 0.0
          %s235 = scalar_lea.vmem [#allocation2], 48
          %236 = vst [vmem:[%s235] sm:$0x3] 0.0
          %237 = vst [vmem:[%s235 + $0x18] sm:$0x3] 0.0
          %238 = vst [vmem:[%s235 + $0x30] sm:$0x3] 0.0
          %239 = vst [vmem:[%s235 + $0x48] sm:$0x3] 0.0
          %240 = vst [vmem:[%s235 + $0x60] sm:$0x3] 0.0
          %241 = vst [vmem:[%s235 + $0x78] sm:$0x3] 0.0
          %242 = vst [vmem:[%s235 + $0x90] sm:$0x3] 0.0
          %243 = vst [vmem:[%s235 + $0xa8] sm:$0x3] 0.0
          %244 = vst [vmem:[%s235 + $0xc0] sm:$0x3] 0.0
          %245 = vst [vmem:[%s235 + $0xd8] sm:$0x3] 0.0
          %246 = vst [vmem:[%s235 + $0xf0] sm:$0x3] 0.0
          %247 = vst [vmem:[%s235 + $0x108] sm:$0x3] 0.0
          %248 = vst [vmem:[%s235 + $0x120] sm:$0x3] 0.0
          %249 = vst [vmem:[%s235 + $0x138] sm:$0x3] 0.0
          %250 = vst [vmem:[%s235 + $0x150] sm:$0x3] 0.0
          %251 = vst [vmem:[%s235 + $0x168] sm:$0x3] 0.0
          %252 = vst [vmem:[%s235 + $0x12] sm:$0x3f] 0.0
          %253 = vst [vmem:[%s235 + $0x2a] sm:$0x3f] 0.0
          %254 = vst [vmem:[%s235 + $0x42] sm:$0x3f] 0.0
          %255 = vst [vmem:[%s235 + $0x5a] sm:$0x3f] 0.0
          %256 = vst [vmem:[%s235 + $0x72] sm:$0x3f] 0.0
          %257 = vst [vmem:[%s235 + $0x8a] sm:$0x3f] 0.0
          %258 = vst [vmem:[%s235 + $0xa2] sm:$0x3f] 0.0
          %259 = vst [vmem:[%s235 + $0xba] sm:$0x3f] 0.0
          %260 = vst [vmem:[%s235 + $0xd2] sm:$0x3f] 0.0
          %261 = vst [vmem:[%s235 + $0xea] sm:$0x3f] 0.0
          %262 = vst [vmem:[%s235 + $0x102] sm:$0x3f] 0.0
          %263 = vst [vmem:[%s235 + $0x11a] sm:$0x3f] 0.0
          %264 = vst [vmem:[%s235 + $0x132] sm:$0x3f] 0.0
          %265 = vst [vmem:[%s235 + $0x14a] sm:$0x3f] 0.0
          %266 = vst [vmem:[%s235 + $0x162] sm:$0x3f] 0.0
          %267 = vst [vmem:[%s235 + $0x17a] sm:$0x3f] 0.0
          %s268 = smul.u32 16, 16
          %s269 = smul.u32 %s268, 1
          %s270 = sshll.u32 %s269, 4
          %271 = dma.done [#allocation3], %s270
        $region36: #{tpu_custom_call.1} parent=27 // pred_fallthru
          _
        %s272 = smul.u32 %s22, 18
        %v273 = vld [vmem:[#allocation4] sm:$0x7]
        %v274 = vld [vmem:[#allocation4 + $0x4] sm:$0x7]
        %v275 = vld [vmem:[#allocation4 + $0x8] sm:$0x7]
        %v276 = vld [vmem:[%s188] sm:$0x1]
        loop: start=0, step=1, limit=18
        $region37: #{tpu_custom_call.1} parent=27 // loop_pre_header
          _
        $region38: #{tpu_custom_call.1} parent=27 // loop_header
          %s278 = sphi 0, %s282
          %p279 = scmp.ge.s32.totalorder %s278, 18
        $region39: #{tpu_custom_call.1} parent=27 // loop_header_branch
          %281 = sbr.rel (%p279) target = $region43
        $region40: #{tpu_custom_call.1} parent=27 // loop_body
          %s283 = sadd.s32 %s272, %s278
          %s284 = smul.u32 %s283, 24
          %s285 = scalar_lea.vmem [#allocation2], %s284
          %v286 = vld [vmem:[%s285] sm:$0xff]
          %v287 = vld [vmem:[%s285 + $0x8] sm:$0xff]
          %v288 = vld [vmem:[%s285 + $0x10] sm:$0xff]
          %v289 = vperm.slane %v273, 0
          %v290 = vmul.f32 %v286, %v289
          %v291 = vmul.f32 %v287, %v289
          %v292 = vmul.f32 %v288, %v289
          %v293 = vadd.f32 %v290, 0.0
          %v294 = vadd.f32 %v291, 0.0
          %v295 = vadd.f32 %v292, 0.0
          %v296 = vperm.slane %v273, 1
          %v297 = vmul.f32 %v286, %v296
          %v298 = vmul.f32 %v287, %v296
          %v299 = vmul.f32 %v288, %v296
          %vm303 = vcmask 1046528
          %v304 = vrot.slane %v297, 1
          %v305 = vrot.slane %v298, 1
          %v306 = vsel %vm303, %v304, %v305
          %v307 = vrot.slane %v299, 1
          %v308 = vsel %vm303, %v305, %v307
          %v312 = vadd.f32 %v293, %v306
          %v313 = vadd.f32 %v294, %v308
          %v314 = vadd.f32 %v295, %v307
          %v315 = vperm.slane %v273, 2
          %v316 = vmul.f32 %v286, %v315
          %v317 = vmul.f32 %v287, %v315
          %v318 = vmul.f32 %v288, %v315
          %vm322 = vcmask 1045504
          %v323 = vrot.slane %v316, 2
          %v324 = vrot.slane %v317, 2
          %v325 = vsel %vm322, %v323, %v324
          %v326 = vrot.slane %v318, 2
          %v327 = vsel %vm322, %v324, %v326
          %v331 = vadd.f32 %v312, %v325
          %v332 = vadd.f32 %v313, %v327
          %v333 = vadd.f32 %v314, %v326
          %s334 = sadd.s32 %s283, 1
          %s335 = smul.u32 %s334, 24
          %s336 = scalar_lea.vmem [#allocation2], %s335
          %v337 = vld [vmem:[%s336] sm:$0xff]
          %v338 = vld [vmem:[%s336 + $0x8] sm:$0xff]
          %v339 = vld [vmem:[%s336 + $0x10] sm:$0xff]
          %v340 = vperm.slane %v274, 0
          %v341 = vmul.f32 %v337, %v340
          %v342 = vmul.f32 %v338, %v340
          %v343 = vmul.f32 %v339, %v340
          %v344 = vadd.f32 %v331, %v341
          %v345 = vadd.f32 %v332, %v342
          %v346 = vadd.f32 %v333, %v343
          %v347 = vperm.slane %v274, 1
          %v348 = vmul.f32 %v337, %v347
          %v349 = vmul.f32 %v338, %v347
          %v350 = vmul.f32 %v339, %v347
          %v354 = vrot.slane %v348, 1
          %v355 = vrot.slane %v349, 1
          %v356 = vsel %vm303, %v354, %v355
          %v357 = vrot.slane %v350, 1
          %v358 = vsel %vm303, %v355, %v357
          %v362 = vadd.f32 %v344, %v356
          %v363 = vadd.f32 %v345, %v358
          %v364 = vadd.f32 %v346, %v357
          %v365 = vperm.slane %v274, 2
          %v366 = vmul.f32 %v337, %v365
          %v367 = vmul.f32 %v338, %v365
          %v368 = vmul.f32 %v339, %v365
          %v372 = vrot.slane %v366, 2
          %v373 = vrot.slane %v367, 2
          %v374 = vsel %vm322, %v372, %v373
          %v375 = vrot.slane %v368, 2
          %v376 = vsel %vm322, %v373, %v375
          %v380 = vadd.f32 %v362, %v374
          %v381 = vadd.f32 %v363, %v376
          %v382 = vadd.f32 %v364, %v375
          %s383 = sadd.s32 %s283, 2
          %s384 = smul.u32 %s383, 24
          %s385 = scalar_lea.vmem [#allocation2], %s384
          %v386 = vld [vmem:[%s385] sm:$0xff]
          %v387 = vld [vmem:[%s385 + $0x8] sm:$0xff]
          %v388 = vld [vmem:[%s385 + $0x10] sm:$0xff]
          %v389 = vperm.slane %v275, 0
          %v390 = vmul.f32 %v386, %v389
          %v391 = vmul.f32 %v387, %v389
          %v392 = vmul.f32 %v388, %v389
          %v393 = vadd.f32 %v380, %v390
          %v394 = vadd.f32 %v381, %v391
          %v395 = vadd.f32 %v382, %v392
          %v396 = vperm.slane %v275, 1
          %v397 = vmul.f32 %v386, %v396
          %v398 = vmul.f32 %v387, %v396
          %v399 = vmul.f32 %v388, %v396
          %v403 = vrot.slane %v397, 1
          %v404 = vrot.slane %v398, 1
          %v405 = vsel %vm303, %v403, %v404
          %v406 = vrot.slane %v399, 1
          %v407 = vsel %vm303, %v404, %v406
          %v411 = vadd.f32 %v393, %v405
          %v412 = vadd.f32 %v394, %v407
          %v413 = vadd.f32 %v395, %v406
          %v414 = vperm.slane %v275, 2
          %v415 = vmul.f32 %v386, %v414
          %v416 = vmul.f32 %v387, %v414
          %v417 = vmul.f32 %v388, %v414
          %v421 = vrot.slane %v415, 2
          %v422 = vrot.slane %v416, 2
          %v423 = vsel %vm322, %v421, %v422
          %v424 = vrot.slane %v417, 2
          %v425 = vsel %vm322, %v422, %v424
          %v429 = vadd.f32 %v411, %v423
          %v430 = vadd.f32 %v412, %v425
          %v431 = vadd.f32 %v413, %v424
          %v433 = vperm.slane %v276, 0
          %v435 = vadd.f32 %v429, %v433
          %v436 = vadd.f32 %v430, %v433
          %v437 = vadd.f32 %v431, %v433
          %s438 = smul.u32 %s278, 24
          %s439 = scalar_lea.vmem %s201, %s438
          %440 = vst [vmem:[%s439] sm:$0xff] %v435
          %441 = vst [vmem:[%s439 + $0x8] sm:$0xff] %v436
          %442 = vst [vmem:[%s439 + $0x10] sm:$0x3] %v437
        $region41: #{tpu_custom_call.1} parent=27 // loop_footer
          %s282 = sadd.s32 1, %s278
        $region42: #{tpu_custom_call.1} parent=27 // loop_footer_branch
          %277 = sbr.rel target = $region38
        $region43: #{tpu_custom_call.1} parent=27 // loop_exit
          _
        %s443 = smul.u32 18, %s22
        %p444 = scmp.lt.s32.totalorder %s20, 1
        %s445 = scalar_select %p444, %s20, 1
        %p446 = scmp.lt.s32.totalorder %s443, 17
        %s447 = scalar_select %p446, %s443, 17
        %p448 = scmp.lt.s32.totalorder %s21, 0
        %s449 = scalar_select %p448, %s21, 0
        %s450 = smul.addr %s447, 3
        %s451 = sadd.s32 %s449, %s450
        %s452 = smul.addr %s445, 54
        %s453 = sadd.s32 %s451, %s452
        %s454 = smul.addr %s453, 8
        %s455 = scalar_lea.vmem %s3, %s454
        // Predicated region
        $region44: #{tpu_custom_call.1} parent=27 // pred_check
          %p456 = pneg %p108
        $region45: #{tpu_custom_call.1} parent=27 // pred_check_branch
          %458 = sbr.rel (%p456) target = $region47
        $region46: #{tpu_custom_call.1} parent=27 // pred_region
          %s459 = smul.u32 18, %s22
        $region47: #{tpu_custom_call.1} parent=27 // pred_fallthru
          _
      $region28: #{tpu_custom_call.1} parent=5 // pred_fallthru
        _
      %p460 = scmp.le.s32.totalorder 2, %s10
      // Predicated region
      $region48: #{tpu_custom_call.1} parent=5 // pred_check
        %p461 = pneg %p460
      $region49: #{tpu_custom_call.1} parent=5 // pred_check_branch
        %463 = sbr.rel (%p461) target = $region51
      $region50: #{tpu_custom_call.1} parent=5 // pred_region
        %s464 = ssub.s32 %s10, 2
        // Predicated region
        $region52: #{tpu_custom_call.1} parent=50 // pred_check
          %p465 = pneg %p114
        $region53: #{tpu_custom_call.1} parent=50 // pred_check_branch
          %467 = sbr.rel (%p465) target = $region55
        $region54: #{tpu_custom_call.1} parent=50 // pred_region
          %s468 = smul.u32 18, %s25
          %p469 = scmp.lt.s32.totalorder %s23, 1
          %s470 = scalar_select %p469, %s23, 1
          %p471 = scmp.lt.s32.totalorder %s468, 17
          %s472 = scalar_select %p471, %s468, 17
          %p473 = scmp.lt.s32.totalorder %s24, 0
          %s474 = scalar_select %p473, %s24, 0
          %s475 = smul.addr %s472, 3
          %s476 = sadd.s32 %s474, %s475
          %s477 = smul.addr %s470, 54
          %s478 = sadd.s32 %s476, %s477
          %s479 = smul.addr %s478, 8
          %s480 = scalar_lea.vmem %s3, %s479
        $region55: #{tpu_custom_call.1} parent=50 // pred_fallthru
          _
      $region51: #{tpu_custom_call.1} parent=5 // pred_fallthru
        _
    $region6: #{tpu_custom_call.1} parent=1 // loop_footer
      %s14 = sadd.s32 1, %s10
    $region7: #{tpu_custom_call.1} parent=1 // loop_footer_branch
      %9 = sbr.rel target = $region3
    $region8: #{tpu_custom_call.1} parent=1 // loop_exit
      _
    %481 = vsyncpa [#allocation5], 1
    %s482 = scalar_lea.sflag [#allocation5], 1
    %483 = vsyncpa %s482, 1
  %484 = vsyncmov [#allocation3]
  %s485 = vpop.sfrf %484
  %p486 = scmp.eq.s32.totalorder %s485, 0
  %p487 = pneg %p486
  %489 = shalt.err (%p487)

</llo_original>
